<compile_context>
chip_gen: v6e
topology: v6e:2x2x1
jax: 0.10.0
libtpu: 0.0.40
codegen_flags: <defaults>
</compile_context>

<pallas_src>
import functools

import jax
import jax.numpy as jnp
import numpy as np
from jax.experimental import pallas as pl
from jax.experimental.pallas import tpu as pltpu


# ---------------------------------------------------------------------------
# Fused ResBlock kernel (one batch element per grid step)
# ---------------------------------------------------------------------------
def _resblock_kernel(x_ref, ml_ref, mr_ref,
                     w1_ref, s1_ref, b1_ref,
                     w2_ref, s2_ref, b2_ref,
                     o_ref,
                     pad1_ref, pad2_ref, col1_ref, col2_ref,
                     *, H, W, learned_shortcut):
    """x_ref:(1,Cin,HW) f32, masks:(1,HW) f32, w*:(C,9*Cin/out) bf16,
    s*/b*:(C,1) f32, o_ref:(1,Cout,HW); pad*/col* are VMEM scratch."""
    HW = H * W
    P = W + 1                                  # flat halo covering all 9 taps
    Cout = o_ref.shape[1]
    mask_l = ml_ref[...]                       # kills the w == 0 column
    mask_r = mr_ref[...]                       # kills the w == W-1 column

    def im2col(x_flat, pad_ref, col_ref):
        # Build the (9*C, HW) column slab for a 3x3 / pad=1 convolution.
        C = x_flat.shape[0]
        pad_ref[...] = jnp.zeros_like(pad_ref)
        pad_ref[:, P:P + HW] = x_flat
        for t in range(9):                     # static, unrolled
            oy, ox = t // 3 - 1, t % 3 - 1
            start = P + oy * W + ox            # static lane offset in [0, 2W+2]
            patch = pad_ref[:, start:start + HW]          # (C, HW) f32
            # Out-of-range rows (h) read the zero halo; only the wrapped-around
            # columns (w) need an explicit mask.
            if ox == -1:
                patch = patch * mask_l
            elif ox == 1:
                patch = patch * mask_r
            col_ref[t * C:(t + 1) * C, :] = patch
        return col_ref[...].astype(jnp.bfloat16)          # bf16 MXU operand

    def conv_bn_relu(col, w_ref, s_ref, b_ref):
        # Single stacked-K MXU matmul (K = 9*C) + f32 BN/ReLU epilogue.
        acc = jnp.dot(w_ref[...], col, preferred_element_type=jnp.float32)
        return jnp.maximum(acc * s_ref[...] + b_ref[...], 0.0)

    x = x_ref[0]                                          # (Cin, HW) f32
    col_x = im2col(x, pad1_ref, col1_ref)                 # shared: conv1+shortcut

    y1 = conv_bn_relu(col_x, w1_ref, s1_ref, b1_ref)      # (C1, HW) f32
    if learned_shortcut:
        h1 = y1[:Cout, :]                                 # conv1 + bn1 + relu1
        x_s = y1[Cout:, :]                                # shortcut conv+bn+relu
    else:
        h1 = y1
        x_s = x                                           # identity shortcut

    col_h = im2col(h1, pad2_ref, col2_ref)
    h2 = conv_bn_relu(col_h, w2_ref, s2_ref, b2_ref)      # conv2 + bn2 + relu2
    o_ref[0] = (x_s + h2).astype(o_ref.dtype)             # residual add


# ---------------------------------------------------------------------------
# Wrapper
# ---------------------------------------------------------------------------
def _flatten_conv_weight(w_oihw):
    """(Cout, Cin, 3, 3) -> (Cout, 9*Cin) bf16, K ordered tap-major/chan-minor."""
    cout, cin = w_oihw.shape[0], w_oihw.shape[1]
    return (jnp.transpose(w_oihw, (0, 2, 3, 1))
            .reshape(cout, 9 * cin).astype(jnp.bfloat16))


def _col_vec(v):
    return jnp.asarray(v, jnp.float32).reshape(-1, 1)


def resblock_forward(x_nchw, params):
    """ResBlock forward (downsample=False), NCHW in/out, one fused pallas_call."""
    (w1, s1, b1), (w2, s2, b2), short = params
    N, Cin, H, W = x_nchw.shape
    Cout = w1.shape[0]
    HW = H * W
    learned_shortcut = short is not None

    # Weights/BN pre-flattened & pre-cast once; constant index_map keeps them
    # resident in VMEM across grid steps (DMA'd once).
    w1f, s1c, b1c = _flatten_conv_weight(w1), _col_vec(s1), _col_vec(b1)
    if learned_shortcut:
        ws, ss, bs = short
        w1f = jnp.concatenate([w1f, _flatten_conv_weight(ws)], axis=0)
        s1c = jnp.concatenate([s1c, _col_vec(ss)], axis=0)
        b1c = jnp.concatenate([b1c, _col_vec(bs)], axis=0)
    w2f, s2c, b2c = _flatten_conv_weight(w2), _col_vec(s2), _col_vec(b2)
    c1 = w1f.shape[0]                               # Cout or 2*Cout

    # 0/1 masks zeroing the wrapped-around w columns of shifted taps.
    w_pos = jnp.arange(HW, dtype=jnp.int32) % W
    mask_l = (w_pos >= 1).astype(jnp.float32).reshape(1, HW)
    mask_r = (w_pos <= W - 2).astype(jnp.float32).reshape(1, HW)

    x_flat = x_nchw.reshape(N, Cin, HW)             # lane-dense, free reshape

    kernel = functools.partial(_resblock_kernel, H=H, W=W,
                               learned_shortcut=learned_shortcut)
    const = lambda n: (0, 0)
    out = pl.pallas_call(
        kernel,
        out_shape=jax.ShapeDtypeStruct((N, Cout, HW), x_nchw.dtype),
        grid_spec=pltpu.PrefetchScalarGridSpec(
            num_scalar_prefetch=0,
            grid=(N,),
            in_specs=[
                pl.BlockSpec((1, Cin, HW), lambda n: (n, 0, 0)),
                pl.BlockSpec((1, HW), const),
                pl.BlockSpec((1, HW), const),
                pl.BlockSpec((c1, 9 * Cin), const),
                pl.BlockSpec((c1, 1), const),
                pl.BlockSpec((c1, 1), const),
                pl.BlockSpec((Cout, 9 * Cout), const),
                pl.BlockSpec((Cout, 1), const),
                pl.BlockSpec((Cout, 1), const),
            ],
            out_specs=pl.BlockSpec((1, Cout, HW), lambda n: (n, 0, 0)),
            scratch_shapes=[
                pltpu.VMEM((Cin, HW + 2 * (W + 1)), jnp.float32),   # pad1
                pltpu.VMEM((Cout, HW + 2 * (W + 1)), jnp.float32),  # pad2
                pltpu.VMEM((9 * Cin, HW), jnp.float32),             # col1
                pltpu.VMEM((9 * Cout, HW), jnp.float32),            # col2
            ]),
        compiler_params=pltpu.CompilerParams(
            dimension_semantics=("parallel",)),     # v7x: both TCs get work
    )(x_flat, mask_l, mask_r, w1f, s1c, b1c, w2f, s2c, b2c)
    return out.reshape(N, Cout, H, W)


# ---------------------------------------------------------------------------
# Parameter helpers (deterministic, in-script)
# ---------------------------------------------------------------------------
def fold_bn(gamma, beta, mean, var, eps=1e-5):
    scale = gamma / jnp.sqrt(var + eps)
    return scale, beta - mean * scale


def make_conv_bn_params(key, cin, cout):
    k = jax.random.split(key, 5)
    w = 0.1 * jax.random.normal(k[0], (cout, cin, 3, 3), jnp.float32)
    gamma = 1.0 + 0.1 * jax.random.normal(k[1], (cout,), jnp.float32)
    beta = 0.1 * jax.random.normal(k[2], (cout,), jnp.float32)
    mean = 0.1 * jax.random.normal(k[3], (cout,), jnp.float32)
    var = jnp.abs(jax.random.normal(k[4], (cout,), jnp.float32)) + 0.5
    scale, bias = fold_bn(gamma, beta, mean, var)
    return w, scale, bias


# ---------------------------------------------------------------------------
# Pure-JAX reference (mirrors the kernel's bf16 MXU operands / f32 accumulate)
# ---------------------------------------------------------------------------
def _ref_conv_bn_relu(x, w, scale, bias):
    y = jax.lax.conv_general_dilated(
        x.astype(jnp.bfloat16), w.astype(jnp.bfloat16),
        window_strides=(1, 1), padding=((1, 1), (1, 1)),
        dimension_numbers=("NCHW", "OIHW", "NCHW"),
        preferred_element_type=jnp.float32)
    s = scale.reshape(1, -1, 1, 1).astype(jnp.float32)
    b = bias.reshape(1, -1, 1, 1).astype(jnp.float32)
    return jnp.maximum(y * s + b, 0.0)


def resblock_reference(x_nchw, params):
    (w1, s1, b1), (w2, s2, b2), short = params
    x_s = _ref_conv_bn_relu(x_nchw, *short) if short is not None else x_nchw
    h = _ref_conv_bn_relu(x_nchw, w1, s1, b1)
    h = _ref_conv_bn_relu(h, w2, s2, b2)
    return x_s + h


if __name__ == "__main__":
    key = jax.random.PRNGKey(0)
    N, Cin, Cout, H, W = 2, 4, 8, 16, 16
    k_in, k1, k2, ks, k3, k4 = jax.random.split(key, 6)

    x = jax.random.normal(k_in, (N, Cin, H, W), jnp.float32)   # NCHW like PyTorch

    # Case 1: in_ch != out_ch -> learned shortcut (conv + bn + relu).
    params = (make_conv_bn_params(k1, Cin, Cout),
              make_conv_bn_params(k2, Cout, Cout),
              make_conv_bn_params(ks, Cin, Cout))
    out = resblock_forward(x, params)
    jax.block_until_ready(out)
    ref = resblock_reference(x, params)
    np.testing.assert_allclose(np.asarray(out), np.asarray(ref),
                               rtol=5e-3, atol=5e-3)
    assert out.shape == (N, Cout, H, W)

    # Case 2: in_ch == out_ch -> identity shortcut.
    params_id = (make_conv_bn_params(k3, Cin, Cin),
                 make_conv_bn_params(k4, Cin, Cin),
                 None)
    out_id = resblock_forward(x, params_id)
    jax.block_until_ready(out_id)
    ref_id = resblock_reference(x, params_id)
    np.testing.assert_allclose(np.asarray(out_id), np.asarray(ref_id),
                               rtol=5e-3, atol=5e-3)
    assert out_id.shape == (N, Cin, H, W)

    print("KERNEL_OK")
</pallas_src>

<mosaic_0001>
module attributes {stable_mosaic.version = 11 : i64} {
  func.func @_resblock_kernel(%arg0: i32, %arg1: memref<1x4x256xf32, #tpu.memory_space<vmem>>, %arg2: memref<1x256xf32, #tpu.memory_space<vmem>>, %arg3: memref<1x256xf32, #tpu.memory_space<vmem>>, %arg4: memref<16x36xbf16, #tpu.memory_space<vmem>>, %arg5: memref<16x1xf32, #tpu.memory_space<vmem>>, %arg6: memref<16x1xf32, #tpu.memory_space<vmem>>, %arg7: memref<8x72xbf16, #tpu.memory_space<vmem>>, %arg8: memref<8x1xf32, #tpu.memory_space<vmem>>, %arg9: memref<8x1xf32, #tpu.memory_space<vmem>>, %arg10: memref<1x8x256xf32, #tpu.memory_space<vmem>>, %arg11: memref<4x290xf32, #tpu.memory_space<vmem>>, %arg12: memref<8x290xf32, #tpu.memory_space<vmem>>, %arg13: memref<36x256xf32, #tpu.memory_space<vmem>>, %arg14: memref<72x256xf32, #tpu.memory_space<vmem>>) attributes {dimension_semantics = [#tpu.dimension_semantics<parallel>], iteration_bounds = array<i64: 2>, scalar_prefetch = 0 : i64, scratch_operands = 4 : i64, tpu.core_type = #tpu.core_type<tc>, window_params = [{transform_indices = @transform_0, window_bounds = array<i64: 1, 4, 256>}, {pipeline_mode = #tpu.pipeline_mode<synchronous>, transform_indices = @transform_1, window_bounds = array<i64: 1, 256>}, {pipeline_mode = #tpu.pipeline_mode<synchronous>, transform_indices = @transform_2, window_bounds = array<i64: 1, 256>}, {pipeline_mode = #tpu.pipeline_mode<synchronous>, transform_indices = @transform_3, window_bounds = array<i64: 16, 36>}, {pipeline_mode = #tpu.pipeline_mode<synchronous>, transform_indices = @transform_4, window_bounds = array<i64: 16, 1>}, {pipeline_mode = #tpu.pipeline_mode<synchronous>, transform_indices = @transform_5, window_bounds = array<i64: 16, 1>}, {pipeline_mode = #tpu.pipeline_mode<synchronous>, transform_indices = @transform_6, window_bounds = array<i64: 8, 72>}, {pipeline_mode = #tpu.pipeline_mode<synchronous>, transform_indices = @transform_7, window_bounds = array<i64: 8, 1>}, {pipeline_mode = #tpu.pipeline_mode<synchronous>, transform_indices = @transform_8, window_bounds = array<i64: 8, 1>}, {transform_indices = @transform_9, window_bounds = array<i64: 1, 8, 256>}]} {
    %c0 = arith.constant 0 : index
    %c0_0 = arith.constant 0 : index
    %0 = vector.load %arg2[%c0, %c0_0] : memref<1x256xf32, #tpu.memory_space<vmem>>, vector<1x256xf32>
    %c0_1 = arith.constant 0 : index
    %c0_2 = arith.constant 0 : index
    %1 = vector.load %arg3[%c0_1, %c0_2] : memref<1x256xf32, #tpu.memory_space<vmem>>, vector<1x256xf32>
    %c0_3 = arith.constant 0 : index
    %c0_4 = arith.constant 0 : index
    %c0_5 = arith.constant 0 : index
    %2 = vector.load %arg1[%c0_3, %c0_4, %c0_5] : memref<1x4x256xf32, #tpu.memory_space<vmem>>, vector<1x4x256xf32>
    %3 = vector.shape_cast %2 : vector<1x4x256xf32> to vector<4x256xf32>
    %cst = arith.constant 0.000000e+00 : f32
    %4 = vector.broadcast %cst : f32 to vector<4x290xf32>
    %c0_6 = arith.constant 0 : index
    %c0_7 = arith.constant 0 : index
    %5 = vector.load %arg11[%c0_6, %c0_7] : memref<4x290xf32, #tpu.memory_space<vmem>>, vector<4x290xf32>
    tpu.vector_store %arg11[%c0_6, %c0_7], %4 {strides = array<i32>} : memref<4x290xf32, #tpu.memory_space<vmem>>, vector<4x290xf32>,
    %c0_8 = arith.constant 0 : index
    %c17 = arith.constant 17 : index
    %6 = vector.load %arg11[%c0_8, %c17] : memref<4x290xf32, #tpu.memory_space<vmem>>, vector<4x256xf32>
    tpu.vector_store %arg11[%c0_8, %c17], %3 {strides = array<i32>} : memref<4x290xf32, #tpu.memory_space<vmem>>, vector<4x256xf32>,
    %c0_9 = arith.constant 0 : index
    %c0_10 = arith.constant 0 : index
    %7 = vector.load %arg11[%c0_9, %c0_10] : memref<4x290xf32, #tpu.memory_space<vmem>>, vector<4x256xf32>
    %8 = vector.broadcast %0 : vector<1x256xf32> to vector<4x256xf32>
    %9 = arith.mulf %7, %8 : vector<4x256xf32>
    %c0_11 = arith.constant 0 : index
    %c0_12 = arith.constant 0 : index
    %10 = vector.load %arg13[%c0_11, %c0_12] : memref<36x256xf32, #tpu.memory_space<vmem>>, vector<4x256xf32>
    tpu.vector_store %arg13[%c0_11, %c0_12], %9 {strides = array<i32>} : memref<36x256xf32, #tpu.memory_space<vmem>>, vector<4x256xf32>,
    %c0_13 = arith.constant 0 : index
    %c1 = arith.constant 1 : index
    %11 = vector.load %arg11[%c0_13, %c1] : memref<4x290xf32, #tpu.memory_space<vmem>>, vector<4x256xf32>
    %c4 = arith.constant 4 : index
    %c0_14 = arith.constant 0 : index
    %12 = vector.load %arg13[%c4, %c0_14] : memref<36x256xf32, #tpu.memory_space<vmem>>, vector<4x256xf32>
    tpu.vector_store %arg13[%c4, %c0_14], %11 {strides = array<i32>} : memref<36x256xf32, #tpu.memory_space<vmem>>, vector<4x256xf32>,
    %c0_15 = arith.constant 0 : index
    %c2 = arith.constant 2 : index
    %13 = vector.load %arg11[%c0_15, %c2] : memref<4x290xf32, #tpu.memory_space<vmem>>, vector<4x256xf32>
    %14 = vector.broadcast %1 : vector<1x256xf32> to vector<4x256xf32>
    %15 = arith.mulf %13, %14 : vector<4x256xf32>
    %c8 = arith.constant 8 : index
    %c0_16 = arith.constant 0 : index
    %16 = vector.load %arg13[%c8, %c0_16] : memref<36x256xf32, #tpu.memory_space<vmem>>, vector<4x256xf32>
    tpu.vector_store %arg13[%c8, %c0_16], %15 {strides = array<i32>} : memref<36x256xf32, #tpu.memory_space<vmem>>, vector<4x256xf32>,
    %c0_17 = arith.constant 0 : index
    %c16 = arith.constant 16 : index
    %17 = vector.load %arg11[%c0_17, %c16] : memref<4x290xf32, #tpu.memory_space<vmem>>, vector<4x256xf32>
    %18 = vector.broadcast %0 : vector<1x256xf32> to vector<4x256xf32>
    %19 = arith.mulf %17, %18 : vector<4x256xf32>
    %c12 = arith.constant 12 : index
    %c0_18 = arith.constant 0 : index
    %20 = vector.load %arg13[%c12, %c0_18] : memref<36x256xf32, #tpu.memory_space<vmem>>, vector<4x256xf32>
    tpu.vector_store %arg13[%c12, %c0_18], %19 {strides = array<i32>} : memref<36x256xf32, #tpu.memory_space<vmem>>, vector<4x256xf32>,
    %c0_19 = arith.constant 0 : index
    %c17_20 = arith.constant 17 : index
    %21 = vector.load %arg11[%c0_19, %c17_20] : memref<4x290xf32, #tpu.memory_space<vmem>>, vector<4x256xf32>
    %c16_21 = arith.constant 16 : index
    %c0_22 = arith.constant 0 : index
    %22 = vector.load %arg13[%c16_21, %c0_22] : memref<36x256xf32, #tpu.memory_space<vmem>>, vector<4x256xf32>
    tpu.vector_store %arg13[%c16_21, %c0_22], %21 {strides = array<i32>} : memref<36x256xf32, #tpu.memory_space<vmem>>, vector<4x256xf32>,
    %c0_23 = arith.constant 0 : index
    %c18 = arith.constant 18 : index
    %23 = vector.load %arg11[%c0_23, %c18] : memref<4x290xf32, #tpu.memory_space<vmem>>, vector<4x256xf32>
    %24 = vector.broadcast %1 : vector<1x256xf32> to vector<4x256xf32>
    %25 = arith.mulf %23, %24 : vector<4x256xf32>
    %c20 = arith.constant 20 : index
    %c0_24 = arith.constant 0 : index
    %26 = vector.load %arg13[%c20, %c0_24] : memref<36x256xf32, #tpu.memory_space<vmem>>, vector<4x256xf32>
    tpu.vector_store %arg13[%c20, %c0_24], %25 {strides = array<i32>} : memref<36x256xf32, #tpu.memory_space<vmem>>, vector<4x256xf32>,
    %c0_25 = arith.constant 0 : index
    %c32 = arith.constant 32 : index
    %27 = vector.load %arg11[%c0_25, %c32] : memref<4x290xf32, #tpu.memory_space<vmem>>, vector<4x256xf32>
    %28 = vector.broadcast %0 : vector<1x256xf32> to vector<4x256xf32>
    %29 = arith.mulf %27, %28 : vector<4x256xf32>
    %c24 = arith.constant 24 : index
    %c0_26 = arith.constant 0 : index
    %30 = vector.load %arg13[%c24, %c0_26] : memref<36x256xf32, #tpu.memory_space<vmem>>, vector<4x256xf32>
    tpu.vector_store %arg13[%c24, %c0_26], %29 {strides = array<i32>} : memref<36x256xf32, #tpu.memory_space<vmem>>, vector<4x256xf32>,
    %c0_27 = arith.constant 0 : index
    %c33 = arith.constant 33 : index
    %31 = vector.load %arg11[%c0_27, %c33] : memref<4x290xf32, #tpu.memory_space<vmem>>, vector<4x256xf32>
    %c28 = arith.constant 28 : index
    %c0_28 = arith.constant 0 : index
    %32 = vector.load %arg13[%c28, %c0_28] : memref<36x256xf32, #tpu.memory_space<vmem>>, vector<4x256xf32>
    tpu.vector_store %arg13[%c28, %c0_28], %31 {strides = array<i32>} : memref<36x256xf32, #tpu.memory_space<vmem>>, vector<4x256xf32>,
    %c0_29 = arith.constant 0 : index
    %c34 = arith.constant 34 : index
    %33 = vector.load %arg11[%c0_29, %c34] : memref<4x290xf32, #tpu.memory_space<vmem>>, vector<4x256xf32>
    %34 = vector.broadcast %1 : vector<1x256xf32> to vector<4x256xf32>
    %35 = arith.mulf %33, %34 : vector<4x256xf32>
    %c32_30 = arith.constant 32 : index
    %c0_31 = arith.constant 0 : index
    %36 = vector.load %arg13[%c32_30, %c0_31] : memref<36x256xf32, #tpu.memory_space<vmem>>, vector<4x256xf32>
    tpu.vector_store %arg13[%c32_30, %c0_31], %35 {strides = array<i32>} : memref<36x256xf32, #tpu.memory_space<vmem>>, vector<4x256xf32>,
    %c0_32 = arith.constant 0 : index
    %c0_33 = arith.constant 0 : index
    %37 = vector.load %arg13[%c0_32, %c0_33] : memref<36x256xf32, #tpu.memory_space<vmem>>, vector<36x256xf32>
    %38 = arith.truncf %37 : vector<36x256xf32> to vector<36x256xbf16>
    %c0_34 = arith.constant 0 : index
    %c0_35 = arith.constant 0 : index
    %39 = vector.load %arg4[%c0_34, %c0_35] : memref<16x36xbf16, #tpu.memory_space<vmem>>, vector<16x36xbf16>
    %cst_36 = arith.constant dense<0.000000e+00> : vector<16x256xf32>
    %40 = tpu.matmul %39, %38, %cst_36 {dimension_numbers = #tpu.dot_dimension_numbers<[1], [0], [0], [1], [0, 0, 1, 1], [], []>} : vector<16x36xbf16>, vector<36x256xbf16>, vector<16x256xf32> -> vector<16x256xf32>
    %c0_37 = arith.constant 0 : index
    %c0_38 = arith.constant 0 : index
    %41 = vector.load %arg5[%c0_37, %c0_38] : memref<16x1xf32, #tpu.memory_space<vmem>>, vector<16x1xf32>
    %42 = vector.broadcast %41 : vector<16x1xf32> to vector<16x256xf32>
    %43 = arith.mulf %40, %42 : vector<16x256xf32>
    %c0_39 = arith.constant 0 : index
    %c0_40 = arith.constant 0 : index
    %44 = vector.load %arg6[%c0_39, %c0_40] : memref<16x1xf32, #tpu.memory_space<vmem>>, vector<16x1xf32>
    %45 = vector.broadcast %44 : vector<16x1xf32> to vector<16x256xf32>
    %46 = arith.addf %43, %45 : vector<16x256xf32>
    %cst_41 = arith.constant 0.000000e+00 : f32
    %47 = vector.broadcast %cst_41 : f32 to vector<16x256xf32>
    %48 = arith.maximumf %46, %47 : vector<16x256xf32>
    %49 = vector.extract_strided_slice %48 {offsets = [0, 0], sizes = [8, 256], strides = [1, 1]} : vector<16x256xf32> to vector<8x256xf32>
    %50 = vector.extract_strided_slice %48 {offsets = [8, 0], sizes = [8, 256], strides = [1, 1]} : vector<16x256xf32> to vector<8x256xf32>
    %cst_42 = arith.constant 0.000000e+00 : f32
    %51 = vector.broadcast %cst_42 : f32 to vector<8x290xf32>
    %c0_43 = arith.constant 0 : index
    %c0_44 = arith.constant 0 : index
    %52 = vector.load %arg12[%c0_43, %c0_44] : memref<8x290xf32, #tpu.memory_space<vmem>>, vector<8x290xf32>
    tpu.vector_store %arg12[%c0_43, %c0_44], %51 {strides = array<i32>} : memref<8x290xf32, #tpu.memory_space<vmem>>, vector<8x290xf32>,
    %c0_45 = arith.constant 0 : index
    %c17_46 = arith.constant 17 : index
    %53 = vector.load %arg12[%c0_45, %c17_46] : memref<8x290xf32, #tpu.memory_space<vmem>>, vector<8x256xf32>
    tpu.vector_store %arg12[%c0_45, %c17_46], %49 {strides = array<i32>} : memref<8x290xf32, #tpu.memory_space<vmem>>, vector<8x256xf32>,
    %c0_47 = arith.constant 0 : index
    %c0_48 = arith.constant 0 : index
    %54 = vector.load %arg12[%c0_47, %c0_48] : memref<8x290xf32, #tpu.memory_space<vmem>>, vector<8x256xf32>
    %55 = vector.broadcast %0 : vector<1x256xf32> to vector<8x256xf32>
    %56 = arith.mulf %54, %55 : vector<8x256xf32>
    %c0_49 = arith.constant 0 : index
    %c0_50 = arith.constant 0 : index
    %57 = vector.load %arg14[%c0_49, %c0_50] : memref<72x256xf32, #tpu.memory_space<vmem>>, vector<8x256xf32>
    tpu.vector_store %arg14[%c0_49, %c0_50], %56 {strides = array<i32>} : memref<72x256xf32, #tpu.memory_space<vmem>>, vector<8x256xf32>,
    %c0_51 = arith.constant 0 : index
    %c1_52 = arith.constant 1 : index
    %58 = vector.load %arg12[%c0_51, %c1_52] : memref<8x290xf32, #tpu.memory_space<vmem>>, vector<8x256xf32>
    %c8_53 = arith.constant 8 : index
    %c0_54 = arith.constant 0 : index
    %59 = vector.load %arg14[%c8_53, %c0_54] : memref<72x256xf32, #tpu.memory_space<vmem>>, vector<8x256xf32>
    tpu.vector_store %arg14[%c8_53, %c0_54], %58 {strides = array<i32>} : memref<72x256xf32, #tpu.memory_space<vmem>>, vector<8x256xf32>,
    %c0_55 = arith.constant 0 : index
    %c2_56 = arith.constant 2 : index
    %60 = vector.load %arg12[%c0_55, %c2_56] : memref<8x290xf32, #tpu.memory_space<vmem>>, vector<8x256xf32>
    %61 = vector.broadcast %1 : vector<1x256xf32> to vector<8x256xf32>
    %62 = arith.mulf %60, %61 : vector<8x256xf32>
    %c16_57 = arith.constant 16 : index
    %c0_58 = arith.constant 0 : index
    %63 = vector.load %arg14[%c16_57, %c0_58] : memref<72x256xf32, #tpu.memory_space<vmem>>, vector<8x256xf32>
    tpu.vector_store %arg14[%c16_57, %c0_58], %62 {strides = array<i32>} : memref<72x256xf32, #tpu.memory_space<vmem>>, vector<8x256xf32>,
    %c0_59 = arith.constant 0 : index
    %c16_60 = arith.constant 16 : index
    %64 = vector.load %arg12[%c0_59, %c16_60] : memref<8x290xf32, #tpu.memory_space<vmem>>, vector<8x256xf32>
    %65 = vector.broadcast %0 : vector<1x256xf32> to vector<8x256xf32>
    %66 = arith.mulf %64, %65 : vector<8x256xf32>
    %c24_61 = arith.constant 24 : index
    %c0_62 = arith.constant 0 : index
    %67 = vector.load %arg14[%c24_61, %c0_62] : memref<72x256xf32, #tpu.memory_space<vmem>>, vector<8x256xf32>
    tpu.vector_store %arg14[%c24_61, %c0_62], %66 {strides = array<i32>} : memref<72x256xf32, #tpu.memory_space<vmem>>, vector<8x256xf32>,
    %c0_63 = arith.constant 0 : index
    %c17_64 = arith.constant 17 : index
    %68 = vector.load %arg12[%c0_63, %c17_64] : memref<8x290xf32, #tpu.memory_space<vmem>>, vector<8x256xf32>
    %c32_65 = arith.constant 32 : index
    %c0_66 = arith.constant 0 : index
    %69 = vector.load %arg14[%c32_65, %c0_66] : memref<72x256xf32, #tpu.memory_space<vmem>>, vector<8x256xf32>
    tpu.vector_store %arg14[%c32_65, %c0_66], %68 {strides = array<i32>} : memref<72x256xf32, #tpu.memory_space<vmem>>, vector<8x256xf32>,
    %c0_67 = arith.constant 0 : index
    %c18_68 = arith.constant 18 : index
    %70 = vector.load %arg12[%c0_67, %c18_68] : memref<8x290xf32, #tpu.memory_space<vmem>>, vector<8x256xf32>
    %71 = vector.broadcast %1 : vector<1x256xf32> to vector<8x256xf32>
    %72 = arith.mulf %70, %71 : vector<8x256xf32>
    %c40 = arith.constant 40 : index
    %c0_69 = arith.constant 0 : index
    %73 = vector.load %arg14[%c40, %c0_69] : memref<72x256xf32, #tpu.memory_space<vmem>>, vector<8x256xf32>
    tpu.vector_store %arg14[%c40, %c0_69], %72 {strides = array<i32>} : memref<72x256xf32, #tpu.memory_space<vmem>>, vector<8x256xf32>,
    %c0_70 = arith.constant 0 : index
    %c32_71 = arith.constant 32 : index
    %74 = vector.load %arg12[%c0_70, %c32_71] : memref<8x290xf32, #tpu.memory_space<vmem>>, vector<8x256xf32>
    %75 = vector.broadcast %0 : vector<1x256xf32> to vector<8x256xf32>
    %76 = arith.mulf %74, %75 : vector<8x256xf32>
    %c48 = arith.constant 48 : index
    %c0_72 = arith.constant 0 : index
    %77 = vector.load %arg14[%c48, %c0_72] : memref<72x256xf32, #tpu.memory_space<vmem>>, vector<8x256xf32>
    tpu.vector_store %arg14[%c48, %c0_72], %76 {strides = array<i32>} : memref<72x256xf32, #tpu.memory_space<vmem>>, vector<8x256xf32>,
    %c0_73 = arith.constant 0 : index
    %c33_74 = arith.constant 33 : index
    %78 = vector.load %arg12[%c0_73, %c33_74] : memref<8x290xf32, #tpu.memory_space<vmem>>, vector<8x256xf32>
    %c56 = arith.constant 56 : index
    %c0_75 = arith.constant 0 : index
    %79 = vector.load %arg14[%c56, %c0_75] : memref<72x256xf32, #tpu.memory_space<vmem>>, vector<8x256xf32>
    tpu.vector_store %arg14[%c56, %c0_75], %78 {strides = array<i32>} : memref<72x256xf32, #tpu.memory_space<vmem>>, vector<8x256xf32>,
    %c0_76 = arith.constant 0 : index
    %c34_77 = arith.constant 34 : index
    %80 = vector.load %arg12[%c0_76, %c34_77] : memref<8x290xf32, #tpu.memory_space<vmem>>, vector<8x256xf32>
    %81 = vector.broadcast %1 : vector<1x256xf32> to vector<8x256xf32>
    %82 = arith.mulf %80, %81 : vector<8x256xf32>
    %c64 = arith.constant 64 : index
    %c0_78 = arith.constant 0 : index
    %83 = vector.load %arg14[%c64, %c0_78] : memref<72x256xf32, #tpu.memory_space<vmem>>, vector<8x256xf32>
    tpu.vector_store %arg14[%c64, %c0_78], %82 {strides = array<i32>} : memref<72x256xf32, #tpu.memory_space<vmem>>, vector<8x256xf32>,
    %c0_79 = arith.constant 0 : index
    %c0_80 = arith.constant 0 : index
    %84 = vector.load %arg14[%c0_79, %c0_80] : memref<72x256xf32, #tpu.memory_space<vmem>>, vector<72x256xf32>
    %85 = arith.truncf %84 : vector<72x256xf32> to vector<72x256xbf16>
    %c0_81 = arith.constant 0 : index
    %c0_82 = arith.constant 0 : index
    %86 = vector.load %arg7[%c0_81, %c0_82] : memref<8x72xbf16, #tpu.memory_space<vmem>>, vector<8x72xbf16>
    %cst_83 = arith.constant dense<0.000000e+00> : vector<8x256xf32>
    %87 = tpu.matmul %86, %85, %cst_83 {dimension_numbers = #tpu.dot_dimension_numbers<[1], [0], [0], [1], [0, 0, 1, 1], [], []>} : vector<8x72xbf16>, vector<72x256xbf16>, vector<8x256xf32> -> vector<8x256xf32>
    %c0_84 = arith.constant 0 : index
    %c0_85 = arith.constant 0 : index
    %88 = vector.load %arg8[%c0_84, %c0_85] : memref<8x1xf32, #tpu.memory_space<vmem>>, vector<8x1xf32>
    %89 = vector.broadcast %88 : vector<8x1xf32> to vector<8x256xf32>
    %90 = arith.mulf %87, %89 : vector<8x256xf32>
    %c0_86 = arith.constant 0 : index
    %c0_87 = arith.constant 0 : index
    %91 = vector.load %arg9[%c0_86, %c0_87] : memref<8x1xf32, #tpu.memory_space<vmem>>, vector<8x1xf32>
    %92 = vector.broadcast %91 : vector<8x1xf32> to vector<8x256xf32>
    %93 = arith.addf %90, %92 : vector<8x256xf32>
    %cst_88 = arith.constant 0.000000e+00 : f32
    %94 = vector.broadcast %cst_88 : f32 to vector<8x256xf32>
    %95 = arith.maximumf %93, %94 : vector<8x256xf32>
    %96 = arith.addf %50, %95 : vector<8x256xf32>
    %c0_89 = arith.constant 0 : index
    %c0_90 = arith.constant 0 : index
    %c0_91 = arith.constant 0 : index
    %97 = vector.load %arg10[%c0_89, %c0_90, %c0_91] : memref<1x8x256xf32, #tpu.memory_space<vmem>>, vector<1x8x256xf32>
    %98 = vector.shape_cast %97 : vector<1x8x256xf32> to vector<8x256xf32>
    %99 = vector.shape_cast %96 : vector<8x256xf32> to vector<1x8x256xf32>
    tpu.vector_store %arg10[%c0_89, %c0_90, %c0_91], %99 {strides = array<i32>} : memref<1x8x256xf32, #tpu.memory_space<vmem>>, vector<1x8x256xf32>,
    return
  }
  func.func @transform_0(%arg0: i32) -> (i32, i32, i32) {
    %c0_i32 = arith.constant 0 : i32
    %c0_i32_0 = arith.constant 0 : i32
    %c0_i32_1 = arith.constant 0 : i32
    return %arg0, %c0_i32, %c0_i32_0 : i32, i32, i32
  }
  func.func @transform_1(%arg0: i32) -> (i32, i32) {
    %c0_i32 = arith.constant 0 : i32
    %c0_i32_0 = arith.constant 0 : i32
    %c0_i32_1 = arith.constant 0 : i32
    return %c0_i32, %c0_i32_0 : i32, i32
  }
  func.func @transform_2(%arg0: i32) -> (i32, i32) {
    %c0_i32 = arith.constant 0 : i32
    %c0_i32_0 = arith.constant 0 : i32
    %c0_i32_1 = arith.constant 0 : i32
    return %c0_i32, %c0_i32_0 : i32, i32
  }
  func.func @transform_3(%arg0: i32) -> (i32, i32) {
    %c0_i32 = arith.constant 0 : i32
    %c0_i32_0 = arith.constant 0 : i32
    %c0_i32_1 = arith.constant 0 : i32
    return %c0_i32, %c0_i32_0 : i32, i32
  }
  func.func @transform_4(%arg0: i32) -> (i32, i32) {
    %c0_i32 = arith.constant 0 : i32
    %c0_i32_0 = arith.constant 0 : i32
    %c0_i32_1 = arith.constant 0 : i32
    return %c0_i32, %c0_i32_0 : i32, i32
  }
  func.func @transform_5(%arg0: i32) -> (i32, i32) {
    %c0_i32 = arith.constant 0 : i32
    %c0_i32_0 = arith.constant 0 : i32
    %c0_i32_1 = arith.constant 0 : i32
    return %c0_i32, %c0_i32_0 : i32, i32
  }
  func.func @transform_6(%arg0: i32) -> (i32, i32) {
    %c0_i32 = arith.constant 0 : i32
    %c0_i32_0 = arith.constant 0 : i32
    %c0_i32_1 = arith.constant 0 : i32
    return %c0_i32, %c0_i32_0 : i32, i32
  }
  func.func @transform_7(%arg0: i32) -> (i32, i32) {
    %c0_i32 = arith.constant 0 : i32
    %c0_i32_0 = arith.constant 0 : i32
    %c0_i32_1 = arith.constant 0 : i32
    return %c0_i32, %c0_i32_0 : i32, i32
  }
  func.func @transform_8(%arg0: i32) -> (i32, i32) {
    %c0_i32 = arith.constant 0 : i32
    %c0_i32_0 = arith.constant 0 : i32
    %c0_i32_1 = arith.constant 0 : i32
    return %c0_i32, %c0_i32_0 : i32, i32
  }
  func.func @transform_9(%arg0: i32) -> (i32, i32, i32) {
    %c0_i32 = arith.constant 0 : i32
    %c0_i32_0 = arith.constant 0 : i32
    %c0_i32_1 = arith.constant 0 : i32
    return %arg0, %c0_i32, %c0_i32_0 : i32, i32, i32
  }
}

</mosaic_0001>

<llo_original>
// kernel: tpu_custom_call.1
$region0: #{tpu_custom_call.1}
  #allocation0 [shape = 'u32[]', space=smem, size = 0x4, offset = 0x4, fixed_abs, tag = 'smem constant byte address 0x4 - core index']
  #allocation1 [shape = 'u32[144,128]{1,0:T(1,128)}', space=vmem, size = 0x12000, scoped, tag = 'internal scratch']
  #allocation2 [shape = 'f32[4,290]{1,0:T(4,128)}', space=vmem, size = 0x1800, scoped, tag = 'scratch operand']
  #allocation3 [shape = 'f32[8,290]{1,0:T(8,128)}', space=vmem, size = 0x3000, scoped, tag = 'scratch operand']
  #allocation4 [shape = 'f32[36,256]{1,0:T(8,128)}', space=vmem, size = 0xa000, scoped, tag = 'scratch operand']
  #allocation5 [shape = 'f32[72,256]{1,0:T(8,128)}', space=vmem, size = 0x12000, scoped, tag = 'scratch operand']
  %s0 = inlined_call_operand.vmem [shape: f32[2,4,256], index: 0, kind: input, shape index: {}]
  %s1 = inlined_call_operand.vmem [shape: f32[1,256], index: 1, kind: input, shape index: {}]
  %s2 = inlined_call_operand.vmem [shape: f32[1,256], index: 2, kind: input, shape index: {}]
  %s3 = inlined_call_operand.vmem [shape: bf16[16,36], index: 3, kind: input, shape index: {}]
  %s4 = inlined_call_operand.vmem [shape: f32[16,1], index: 4, kind: input, shape index: {}]
  %s5 = inlined_call_operand.vmem [shape: f32[16,1], index: 5, kind: input, shape index: {}]
  %s6 = inlined_call_operand.vmem [shape: bf16[8,72], index: 6, kind: input, shape index: {}]
  %s7 = inlined_call_operand.vmem [shape: f32[8,1], index: 7, kind: input, shape index: {}]
  %s8 = inlined_call_operand.vmem [shape: f32[8,1], index: 8, kind: input, shape index: {}]
  %s9 = inlined_call_operand.hbm [shape: f32[2,8,256], index: 9, kind: output, shape index: {}]
  %s10 = sld [smem:[#allocation0]]
  $region69: #{tpu_custom_call.1} parent=0
    _
  %s12 = ssub.s32 1, %s10
  %s13 = scalar_select 0, %s12, %s10
  $region1: #{tpu_custom_call.1} parent=0
    #allocation6 [shape = 'u8[16384]{0}', space=vmem, size = 0x4000, scoped, tag = 'output window, operand 0']
    #allocation7 [shape = 's32[2]{0}', space=sflag, size = 0x8, scoped, tag = 'scoped memory for tpu_custom_call.1']
    %14 = vsyncpa [#allocation7], 0
    %s15 = scalar_lea.sflag [#allocation7], 1
    %16 = vsyncpa %s15, 0
    loop: start=0, step=1, limit=4
    $region2: #{tpu_custom_call.1} parent=1 // loop_pre_header
      _
    $region3: #{tpu_custom_call.1} parent=1 // loop_header
      %s18 = sphi 0, %s22
      %p19 = scmp.ge.s32.totalorder %s18, 4
      %s28 = sphi 0, %s30
      %s31 = sphi 0, %s28
      %s32 = sphi 0, %s31
      %s48 = sphi 0, %s32
      %s52 = sphi 0, %s52
      %s54 = sphi 0, %s52
      %s55 = sphi 0, %s54
      %s69 = sphi 0, %s55
      %s73 = sphi 0, %s73
      %s75 = sphi 0, %s73
      %s76 = sphi 0, %s75
      %s90 = sphi 0, %s76
      %s94 = sphi 0, %s94
      %s96 = sphi 0, %s94
      %s97 = sphi 0, %s96
      %s111 = sphi 0, %s97
      %s115 = sphi 0, %s115
      %s117 = sphi 0, %s115
      %s118 = sphi 0, %s117
      %s132 = sphi 0, %s118
      %s136 = sphi 0, %s136
      %s138 = sphi 0, %s136
      %s139 = sphi 0, %s138
      %s153 = sphi 0, %s139
      %s157 = sphi 0, %s157
      %s159 = sphi 0, %s157
      %s160 = sphi 0, %s159
      %s174 = sphi 0, %s160
      %s178 = sphi 0, %s178
      %s180 = sphi 0, %s178
      %s181 = sphi 0, %s180
      %s195 = sphi 0, %s181
      %s199 = sphi 0, %s199
      %s201 = sphi 0, %s199
      %s202 = sphi 0, %s201
      %s216 = sphi 0, %s202
      %s222 = sphi 0, %s224
      %s225 = sphi 0, %s222
      %s226 = sphi 0, %s225
      %s242 = sphi 0, %s226
    $region4: #{tpu_custom_call.1} parent=1 // loop_header_branch
      %21 = sbr.rel (%p19) target = $region8
    $region5: #{tpu_custom_call.1} parent=1 // loop_body
      %s23 = ssub.s32 %s18, 1
      %s24 = ssub.s32 %s18, 2
      %s25 = sadd.s32 %s18, 1
      %s26 = ssub.s32 %s18, %s25
      %p27 = scmp.eq.s32.totalorder %s26, 0
      %s29 = sadd.s32 %s28, 1
      %s30 = scalar_select %p27, %s28, %s29
      %p33 = pneg %p27
      %p34 = scmp.eq.s32.totalorder %s18, 1
      %p35 = por %p33, %p34
      %p36 = scmp.ne.s32.totalorder %s28, %s31
      %p37 = scmp.eq.s32.totalorder %s18, 0
      %p38 = por %p36, %p37
      %p39 = scmp.ne.s32.totalorder %s28, %s31
      %p40 = scmp.eq.s32.totalorder %s23, 1
      %p41 = por %p39, %p40
      %p42 = scmp.ne.s32.totalorder %s31, %s32
      %p43 = scmp.eq.s32.totalorder %s23, 0
      %p44 = por %p42, %p43
      %p45 = scmp.ne.s32.totalorder %s31, %s32
      %p46 = scmp.eq.s32.totalorder %s24, 1
      %p47 = por %p45, %p46
      %p49 = scmp.ne.s32.totalorder %s32, %s48
      %p50 = scmp.eq.s32.totalorder %s24, 0
      %p51 = por %p49, %p50
      %s53 = sadd.s32 %s52, 1
      %p56 = scmp.eq.s32.totalorder %s18, 1
      %p57 = scmp.ne.s32.totalorder %s52, %s54
      %p58 = scmp.eq.s32.totalorder %s18, 0
      %p59 = por %p57, %p58
      %p60 = scmp.ne.s32.totalorder %s52, %s54
      %p61 = scmp.eq.s32.totalorder %s23, 1
      %p62 = por %p60, %p61
      %p63 = scmp.ne.s32.totalorder %s54, %s55
      %p64 = scmp.eq.s32.totalorder %s23, 0
      %p65 = por %p63, %p64
      %p66 = scmp.ne.s32.totalorder %s54, %s55
      %p67 = scmp.eq.s32.totalorder %s24, 1
      %p68 = por %p66, %p67
      %p70 = scmp.ne.s32.totalorder %s55, %s69
      %p71 = scmp.eq.s32.totalorder %s24, 0
      %p72 = por %p70, %p71
      %s74 = sadd.s32 %s73, 1
      %p77 = scmp.eq.s32.totalorder %s18, 1
      %p78 = scmp.ne.s32.totalorder %s73, %s75
      %p79 = scmp.eq.s32.totalorder %s18, 0
      %p80 = por %p78, %p79
      %p81 = scmp.ne.s32.totalorder %s73, %s75
      %p82 = scmp.eq.s32.totalorder %s23, 1
      %p83 = por %p81, %p82
      %p84 = scmp.ne.s32.totalorder %s75, %s76
      %p85 = scmp.eq.s32.totalorder %s23, 0
      %p86 = por %p84, %p85
      %p87 = scmp.ne.s32.totalorder %s75, %s76
      %p88 = scmp.eq.s32.totalorder %s24, 1
      %p89 = por %p87, %p88
      %p91 = scmp.ne.s32.totalorder %s76, %s90
      %p92 = scmp.eq.s32.totalorder %s24, 0
      %p93 = por %p91, %p92
      %s95 = sadd.s32 %s94, 1
      %p98 = scmp.eq.s32.totalorder %s18, 1
      %p99 = scmp.ne.s32.totalorder %s94, %s96
      %p100 = scmp.eq.s32.totalorder %s18, 0
      %p101 = por %p99, %p100
      %p102 = scmp.ne.s32.totalorder %s94, %s96
      %p103 = scmp.eq.s32.totalorder %s23, 1
      %p104 = por %p102, %p103
      %p105 = scmp.ne.s32.totalorder %s96, %s97
      %p106 = scmp.eq.s32.totalorder %s23, 0
      %p107 = por %p105, %p106
      %p108 = scmp.ne.s32.totalorder %s96, %s97
      %p109 = scmp.eq.s32.totalorder %s24, 1
      %p110 = por %p108, %p109
      %p112 = scmp.ne.s32.totalorder %s97, %s111
      %p113 = scmp.eq.s32.totalorder %s24, 0
      %p114 = por %p112, %p113
      %s116 = sadd.s32 %s115, 1
      %p119 = scmp.eq.s32.totalorder %s18, 1
      %p120 = scmp.ne.s32.totalorder %s115, %s117
      %p121 = scmp.eq.s32.totalorder %s18, 0
      %p122 = por %p120, %p121
      %p123 = scmp.ne.s32.totalorder %s115, %s117
      %p124 = scmp.eq.s32.totalorder %s23, 1
      %p125 = por %p123, %p124
      %p126 = scmp.ne.s32.totalorder %s117, %s118
      %p127 = scmp.eq.s32.totalorder %s23, 0
      %p128 = por %p126, %p127
      %p129 = scmp.ne.s32.totalorder %s117, %s118
      %p130 = scmp.eq.s32.totalorder %s24, 1
      %p131 = por %p129, %p130
      %p133 = scmp.ne.s32.totalorder %s118, %s132
      %p134 = scmp.eq.s32.totalorder %s24, 0
      %p135 = por %p133, %p134
      %s137 = sadd.s32 %s136, 1
      %p140 = scmp.eq.s32.totalorder %s18, 1
      %p141 = scmp.ne.s32.totalorder %s136, %s138
      %p142 = scmp.eq.s32.totalorder %s18, 0
      %p143 = por %p141, %p142
      %p144 = scmp.ne.s32.totalorder %s136, %s138
      %p145 = scmp.eq.s32.totalorder %s23, 1
      %p146 = por %p144, %p145
      %p147 = scmp.ne.s32.totalorder %s138, %s139
      %p148 = scmp.eq.s32.totalorder %s23, 0
      %p149 = por %p147, %p148
      %p150 = scmp.ne.s32.totalorder %s138, %s139
      %p151 = scmp.eq.s32.totalorder %s24, 1
      %p152 = por %p150, %p151
      %p154 = scmp.ne.s32.totalorder %s139, %s153
      %p155 = scmp.eq.s32.totalorder %s24, 0
      %p156 = por %p154, %p155
      %s158 = sadd.s32 %s157, 1
      %p161 = scmp.eq.s32.totalorder %s18, 1
      %p162 = scmp.ne.s32.totalorder %s157, %s159
      %p163 = scmp.eq.s32.totalorder %s18, 0
      %p164 = por %p162, %p163
      %p165 = scmp.ne.s32.totalorder %s157, %s159
      %p166 = scmp.eq.s32.totalorder %s23, 1
      %p167 = por %p165, %p166
      %p168 = scmp.ne.s32.totalorder %s159, %s160
      %p169 = scmp.eq.s32.totalorder %s23, 0
      %p170 = por %p168, %p169
      %p171 = scmp.ne.s32.totalorder %s159, %s160
      %p172 = scmp.eq.s32.totalorder %s24, 1
      %p173 = por %p171, %p172
      %p175 = scmp.ne.s32.totalorder %s160, %s174
      %p176 = scmp.eq.s32.totalorder %s24, 0
      %p177 = por %p175, %p176
      %s179 = sadd.s32 %s178, 1
      %p182 = scmp.eq.s32.totalorder %s18, 1
      %p183 = scmp.ne.s32.totalorder %s178, %s180
      %p184 = scmp.eq.s32.totalorder %s18, 0
      %p185 = por %p183, %p184
      %p186 = scmp.ne.s32.totalorder %s178, %s180
      %p187 = scmp.eq.s32.totalorder %s23, 1
      %p188 = por %p186, %p187
      %p189 = scmp.ne.s32.totalorder %s180, %s181
      %p190 = scmp.eq.s32.totalorder %s23, 0
      %p191 = por %p189, %p190
      %p192 = scmp.ne.s32.totalorder %s180, %s181
      %p193 = scmp.eq.s32.totalorder %s24, 1
      %p194 = por %p192, %p193
      %p196 = scmp.ne.s32.totalorder %s181, %s195
      %p197 = scmp.eq.s32.totalorder %s24, 0
      %p198 = por %p196, %p197
      %s200 = sadd.s32 %s199, 1
      %p203 = scmp.eq.s32.totalorder %s18, 1
      %p204 = scmp.ne.s32.totalorder %s199, %s201
      %p205 = scmp.eq.s32.totalorder %s18, 0
      %p206 = por %p204, %p205
      %p207 = scmp.ne.s32.totalorder %s199, %s201
      %p208 = scmp.eq.s32.totalorder %s23, 1
      %p209 = por %p207, %p208
      %p210 = scmp.ne.s32.totalorder %s201, %s202
      %p211 = scmp.eq.s32.totalorder %s23, 0
      %p212 = por %p210, %p211
      %p213 = scmp.ne.s32.totalorder %s201, %s202
      %p214 = scmp.eq.s32.totalorder %s24, 1
      %p215 = por %p213, %p214
      %p217 = scmp.ne.s32.totalorder %s202, %s216
      %p218 = scmp.eq.s32.totalorder %s24, 0
      %p219 = por %p217, %p218
      %s220 = ssub.s32 %s18, %s25
      %p221 = scmp.eq.s32.totalorder %s220, 0
      %s223 = sadd.s32 %s222, 1
      %s224 = scalar_select %p221, %s222, %s223
      %p227 = pneg %p221
      %p228 = scmp.eq.s32.totalorder %s18, 1
      %p229 = por %p227, %p228
      %p230 = scmp.ne.s32.totalorder %s222, %s225
      %p231 = scmp.eq.s32.totalorder %s18, 0
      %p232 = por %p230, %p231
      %p233 = scmp.ne.s32.totalorder %s222, %s225
      %p234 = scmp.eq.s32.totalorder %s23, 1
      %p235 = por %p233, %p234
      %p236 = scmp.ne.s32.totalorder %s225, %s226
      %p237 = scmp.eq.s32.totalorder %s23, 0
      %p238 = por %p236, %p237
      %p239 = scmp.ne.s32.totalorder %s225, %s226
      %p240 = scmp.eq.s32.totalorder %s24, 1
      %p241 = por %p239, %p240
      %p243 = scmp.ne.s32.totalorder %s226, %s242
      %p244 = scmp.eq.s32.totalorder %s24, 0
      %p245 = por %p243, %p244
      %p246 = scmp.le.s32.totalorder 1, %s18
      %p247 = scmp.lt.s32.totalorder %s18, 3
      %p248 = pnand %p246, %p247
      %p249 = pneg %p248
      // Predicated region
      $region9: #{tpu_custom_call.1} parent=5 // pred_check
        _
      $region10: #{tpu_custom_call.1} parent=5 // pred_check_branch
        %251 = sbr.rel (%p248) target = $region12
      $region11: #{tpu_custom_call.1} parent=5 // pred_region
        %s252 = ssub.s32 %s18, 1
        // Predicated region
        $region13: #{tpu_custom_call.1} parent=11 // pred_check
          %p253 = pneg %p65
        $region14: #{tpu_custom_call.1} parent=11 // pred_check_branch
          %255 = sbr.rel (%p253) target = $region16
        $region15: #{tpu_custom_call.1} parent=11 // pred_region
          _
        $region16: #{tpu_custom_call.1} parent=11 // pred_fallthru
          _
        // Predicated region
        $region17: #{tpu_custom_call.1} parent=11 // pred_check
          %p256 = pneg %p86
        $region18: #{tpu_custom_call.1} parent=11 // pred_check_branch
          %258 = sbr.rel (%p256) target = $region20
        $region19: #{tpu_custom_call.1} parent=11 // pred_region
          _
        $region20: #{tpu_custom_call.1} parent=11 // pred_fallthru
          _
        // Predicated region
        $region21: #{tpu_custom_call.1} parent=11 // pred_check
          %p259 = pneg %p107
        $region22: #{tpu_custom_call.1} parent=11 // pred_check_branch
          %261 = sbr.rel (%p259) target = $region24
        $region23: #{tpu_custom_call.1} parent=11 // pred_region
          _
        $region24: #{tpu_custom_call.1} parent=11 // pred_fallthru
          _
        // Predicated region
        $region25: #{tpu_custom_call.1} parent=11 // pred_check
          %p262 = pneg %p128
        $region26: #{tpu_custom_call.1} parent=11 // pred_check_branch
          %264 = sbr.rel (%p262) target = $region28
        $region27: #{tpu_custom_call.1} parent=11 // pred_region
          _
        $region28: #{tpu_custom_call.1} parent=11 // pred_fallthru
          _
        // Predicated region
        $region29: #{tpu_custom_call.1} parent=11 // pred_check
          %p265 = pneg %p149
        $region30: #{tpu_custom_call.1} parent=11 // pred_check_branch
          %267 = sbr.rel (%p265) target = $region32
        $region31: #{tpu_custom_call.1} parent=11 // pred_region
          _
        $region32: #{tpu_custom_call.1} parent=11 // pred_fallthru
          _
        // Predicated region
        $region33: #{tpu_custom_call.1} parent=11 // pred_check
          %p268 = pneg %p170
        $region34: #{tpu_custom_call.1} parent=11 // pred_check_branch
          %270 = sbr.rel (%p268) target = $region36
        $region35: #{tpu_custom_call.1} parent=11 // pred_region
          _
        $region36: #{tpu_custom_call.1} parent=11 // pred_fallthru
          _
        // Predicated region
        $region37: #{tpu_custom_call.1} parent=11 // pred_check
          %p271 = pneg %p191
        $region38: #{tpu_custom_call.1} parent=11 // pred_check_branch
          %273 = sbr.rel (%p271) target = $region40
        $region39: #{tpu_custom_call.1} parent=11 // pred_region
          _
        $region40: #{tpu_custom_call.1} parent=11 // pred_fallthru
          _
        // Predicated region
        $region41: #{tpu_custom_call.1} parent=11 // pred_check
          %p274 = pneg %p212
        $region42: #{tpu_custom_call.1} parent=11 // pred_check_branch
          %276 = sbr.rel (%p274) target = $region44
        $region43: #{tpu_custom_call.1} parent=11 // pred_region
          _
        $region44: #{tpu_custom_call.1} parent=11 // pred_fallthru
          _
      $region12: #{tpu_custom_call.1} parent=5 // pred_fallthru
        _
      %p277 = scmp.lt.s32.totalorder %s18, 2
      // Predicated region
      $region45: #{tpu_custom_call.1} parent=5 // pred_check
        %p278 = pneg %p277
      $region46: #{tpu_custom_call.1} parent=5 // pred_check_branch
        %280 = sbr.rel (%p278) target = $region48
      $region47: #{tpu_custom_call.1} parent=5 // pred_region
        // Predicated region
        $region49: #{tpu_custom_call.1} parent=47 // pred_check
          %p281 = pneg %p38
        $region50: #{tpu_custom_call.1} parent=47 // pred_check_branch
          %283 = sbr.rel (%p281) target = $region52
        $region51: #{tpu_custom_call.1} parent=47 // pred_region
          %p284 = scmp.lt.s32.totalorder %s18, 1
          %s285 = scalar_select %p284, %s18, 1
          %s286 = smul.addr %s285, 2
          %s287 = smul.addr %s286, 4
          %s288 = scalar_lea.vmem %s0, %s287
        $region52: #{tpu_custom_call.1} parent=47 // pred_fallthru
          _
      $region48: #{tpu_custom_call.1} parent=5 // pred_fallthru
        _
      %p289 = scmp.le.s32.totalorder 1, %s18
      %p290 = scmp.lt.s32.totalorder %s18, 3
      %p291 = pnand %p289, %p290
      %p292 = pneg %p291
      // Predicated region
      $region53: #{tpu_custom_call.1} parent=5 // pred_check
        _
      $region54: #{tpu_custom_call.1} parent=5 // pred_check_branch
        %294 = sbr.rel (%p291) target = $region56
      $region55: #{tpu_custom_call.1} parent=5 // pred_region
        %s295 = ssub.s32 %s18, 1
        %p296 = scmp.lt.s32.totalorder %s23, 1
        %s297 = scalar_select %p296, %s23, 1
        %s298 = smul.addr %s297, 2
        %s299 = smul.addr %s298, 4
        %s300 = scalar_lea.vmem %s0, %s299
        %p301 = pneg %p44
        %p302 = pneg %p41
        %p303 = pneg %p65
        %p304 = pneg %p62
        %p305 = pneg %p86
        %p306 = pneg %p83
        %p307 = pneg %p107
        %p308 = pneg %p104
        %p309 = pneg %p128
        %p310 = pneg %p125
        %p311 = pneg %p149
        %p312 = pneg %p146
        %p313 = pneg %p170
        %p314 = pneg %p167
        %p315 = pneg %p191
        %p316 = pneg %p188
        %p317 = pneg %p212
        %p318 = pneg %p209
        %p319 = pneg %p238
        %p320 = pneg %p235
        %s321 = sand.u32 %s225, 1
        %s322 = scalar_lea.sflag [#allocation7], %s321
        %s323 = sand.u32 %s225, 1
        %s324 = smul.addr %s323, 16
        %s325 = scalar_lea.vmem [#allocation6], %s324
        %p326 = scmp.lt.s32.totalorder %s23, 1
        %s327 = scalar_select %p326, %s23, 1
        %s328 = smul.addr %s327, 2
        %s329 = smul.addr %s328, 4
        %s330 = scalar_lea.vmem %s0, %s329
        %v332 = vld [vmem:[%s1] sm:$0x3]
        %v333 = vld [vmem:[%s2] sm:$0x3]
        %v334 = vld [vmem:[%s330] sm:$0xff]
        %335 = vst [vmem:[#allocation2] sm:$0xff] 0.0
        %vm336 = vcmask 273408
        %337 = vst.msk [vmem:[#allocation2 + $0x8] sm:$0xf] %vm336, 0.0
        %339 = vrot.lane.b32.xlu0 %v334, 17
        %v340 = vpop.permute.xlu0 %339
        %v341 = vrot.slane %v340, 4
        %vm342 = vcmask 138240
        %v343 = vsel %vm342, %v341, %v340
        %vm346 = vcmask 1043592
        %vm347 = vcmask 1047556
        %vm348 = vmor %vm347, %vm346
        %349 = vst.msk [vmem:[#allocation2] sm:$0xff] %vm348, %v343
        %vm350 = vcmask 134144
        %351 = vst.msk [vmem:[#allocation2 + $0x8] sm:$0xf] %vm350, %v341
        %v352 = vld [vmem:[#allocation2] sm:$0xff]
        %v354 = vlaneseq
        %v355 = vshrl.u32 %v354, 7
        %v356 = vsub.s32 0, %v355
        %v357 = vrot.slane %v332, %v356
        %v358 = vlaneseq
        %v359 = vshrl.u32 %v358, 7
        %v360 = vsub.s32 1, %v359
        %v361 = vrot.slane %v332, %v360
        %v362 = vcombine.low %v357, %v361
        %v364 = vmul.f32 %v352, %v362
        %v366 = vcombine.high %v364, %v364
        %368 = vst [vmem:[#allocation4] sm:$0xf] %v364
        %369 = vst [vmem:[#allocation4 + $0x8] sm:$0xf] %v366
        %v370 = vld [vmem:[#allocation2] sm:$0xff]
        %v371 = vld [vmem:[#allocation2 + $0x8] sm:$0xf]
        %v374 = vcombine.low %v370, %v370
        %v375 = vcombine.low %v371, %v371
        %376 = vrot.lane.b32.xlu0 %v374, 127
        %v377 = vpop.permute.xlu0 %376
        %378 = vrot.lane.b32.xlu0 %v370, 127
        %v379 = vpop.permute.xlu0 %378
        %380 = vrot.lane.b32.xlu0 %v375, 127
        %v381 = vpop.permute.xlu0 %380
        %vm382 = vcmask 1039360
        %v383 = vsel %vm382, %v377, %v379
        %v384 = vsel %vm382, %v379, %v381
        %387 = vst [vmem:[#allocation4] sm:$0xf0] %v383
        %388 = vst [vmem:[#allocation4 + $0x8] sm:$0xf0] %v384
        %v389 = vld [vmem:[#allocation2] sm:$0xff]
        %v390 = vld [vmem:[#allocation2 + $0x8] sm:$0xf]
        %v392 = vlaneseq
        %v393 = vshrl.u32 %v392, 7
        %v394 = vsub.s32 0, %v393
        %v395 = vrot.slane %v333, %v394
        %v396 = vlaneseq
        %v397 = vshrl.u32 %v396, 7
        %v398 = vsub.s32 1, %v397
        %v399 = vrot.slane %v333, %v398
        %v400 = vcombine.low %v395, %v399
        %401 = vrot.lane.b32.xlu0 %v400, 2
        %v402 = vpop.permute.xlu0 %401
        %v403 = vrot.slane %v402, 4
        %vm404 = vcmask 15360
        %v405 = vsel %vm404, %v403, %v402
        %v408 = vmul.f32 %v389, %v405
        %v409 = vmul.f32 %v390, %v403
        %v412 = vcombine.high %v408, %v408
        %413 = vrot.lane.b32.xlu0 %v408, 126
        %v414 = vpop.permute.xlu0 %413
        %415 = vrot.lane.b32.xlu0 %v412, 126
        %v416 = vpop.permute.xlu0 %415
        %417 = vrot.lane.b32.xlu0 %v409, 126
        %v418 = vpop.permute.xlu0 %417
        %vm419 = vcmask 1031168
        %v420 = vsel %vm419, %v414, %v416
        %v421 = vsel %vm419, %v416, %v418
        %424 = vst [vmem:[#allocation4 + $0x10] sm:$0xf] %v420
        %425 = vst [vmem:[#allocation4 + $0x18] sm:$0xf] %v421
        %v426 = vld [vmem:[#allocation2] sm:$0xff]
        %v427 = vld [vmem:[#allocation2 + $0x8] sm:$0xf]
        %428 = vrot.lane.b32.xlu0 %v362, 16
        %v429 = vpop.permute.xlu0 %428
        %v430 = vrot.slane %v429, 4
        %vm431 = vcmask 130048
        %v432 = vsel %vm431, %v430, %v429
        %v435 = vmul.f32 %v426, %v432
        %v436 = vmul.f32 %v427, %v430
        %v439 = vcombine.low %v435, %v435
        %v440 = vcombine.low %v436, %v436
        %441 = vrot.lane.b32.xlu0 %v439, 112
        %v442 = vpop.permute.xlu0 %441
        %443 = vrot.lane.b32.xlu0 %v435, 112
        %v444 = vpop.permute.xlu0 %443
        %445 = vrot.lane.b32.xlu0 %v440, 112
        %v446 = vpop.permute.xlu0 %445
        %vm447 = vcmask 916480
        %v448 = vsel %vm447, %v442, %v444
        %v449 = vsel %vm447, %v444, %v446
        %452 = vst [vmem:[#allocation4 + $0x10] sm:$0xf0] %v448
        %453 = vst [vmem:[#allocation4 + $0x18] sm:$0xf0] %v449
        %v454 = vld [vmem:[#allocation2] sm:$0xff]
        %v455 = vld [vmem:[#allocation2 + $0x8] sm:$0xf]
        %v458 = vcombine.high %v454, %v454
        %459 = vrot.lane.b32.xlu0 %v454, 111
        %v460 = vpop.permute.xlu0 %459
        %461 = vrot.lane.b32.xlu0 %v458, 111
        %v462 = vpop.permute.xlu0 %461
        %463 = vrot.lane.b32.xlu0 %v455, 111
        %v464 = vpop.permute.xlu0 %463
        %vm465 = vcmask 908288
        %v466 = vsel %vm465, %v460, %v462
        %v467 = vsel %vm465, %v462, %v464
        %470 = vst [vmem:[#allocation4 + $0x20] sm:$0xf] %v466
        %471 = vst [vmem:[#allocation4 + $0x28] sm:$0xf] %v467
        %v472 = vld [vmem:[#allocation2] sm:$0xff]
        %v473 = vld [vmem:[#allocation2 + $0x8] sm:$0xf]
        %474 = vrot.lane.b32.xlu0 %v400, 18
        %v475 = vpop.permute.xlu0 %474
        %v476 = vrot.slane %v475, 4
        %vm477 = vcmask 146432
        %v478 = vsel %vm477, %v476, %v475
        %v481 = vmul.f32 %v472, %v478
        %v482 = vmul.f32 %v473, %v476
        %v485 = vcombine.low %v481, %v481
        %v486 = vcombine.low %v482, %v482
        %487 = vrot.lane.b32.xlu0 %v485, 110
        %v488 = vpop.permute.xlu0 %487
        %489 = vrot.lane.b32.xlu0 %v481, 110
        %v490 = vpop.permute.xlu0 %489
        %491 = vrot.lane.b32.xlu0 %v486, 110
        %v492 = vpop.permute.xlu0 %491
        %vm493 = vcmask 900096
        %v494 = vsel %vm493, %v488, %v490
        %v495 = vsel %vm493, %v490, %v492
        %498 = vst [vmem:[#allocation4 + $0x20] sm:$0xf0] %v494
        %499 = vst [vmem:[#allocation4 + $0x28] sm:$0xf0] %v495
        %v500 = vld [vmem:[#allocation2] sm:$0xff]
        %v501 = vld [vmem:[#allocation2 + $0x8] sm:$0xf]
        %502 = vrot.lane.b32.xlu0 %v362, 32
        %v503 = vpop.permute.xlu0 %502
        %v504 = vrot.slane %v503, 4
        %vm505 = vcmask 261120
        %v506 = vsel %vm505, %v504, %v503
        %v509 = vmul.f32 %v500, %v506
        %v510 = vmul.f32 %v501, %v504
        %v513 = vcombine.high %v509, %v509
        %514 = vrot.lane.b32.xlu0 %v509, 96
        %v515 = vpop.permute.xlu0 %514
        %516 = vrot.lane.b32.xlu0 %v513, 96
        %v517 = vpop.permute.xlu0 %516
        %518 = vrot.lane.b32.xlu0 %v510, 96
        %v519 = vpop.permute.xlu0 %518
        %vm520 = vcmask 785408
        %v521 = vsel %vm520, %v515, %v517
        %v522 = vsel %vm520, %v517, %v519
        %525 = vst [vmem:[#allocation4 + $0x30] sm:$0xf] %v521
        %526 = vst [vmem:[#allocation4 + $0x38] sm:$0xf] %v522
        %v527 = vld [vmem:[#allocation2] sm:$0xff]
        %v528 = vld [vmem:[#allocation2 + $0x8] sm:$0xf]
        %v531 = vcombine.low %v527, %v527
        %v532 = vcombine.low %v528, %v528
        %533 = vrot.lane.b32.xlu0 %v531, 95
        %v534 = vpop.permute.xlu0 %533
        %535 = vrot.lane.b32.xlu0 %v527, 95
        %v536 = vpop.permute.xlu0 %535
        %537 = vrot.lane.b32.xlu0 %v532, 95
        %v538 = vpop.permute.xlu0 %537
        %vm539 = vcmask 777216
        %v540 = vsel %vm539, %v534, %v536
        %v541 = vsel %vm539, %v536, %v538
        %544 = vst [vmem:[#allocation4 + $0x30] sm:$0xf0] %v540
        %545 = vst [vmem:[#allocation4 + $0x38] sm:$0xf0] %v541
        %v546 = vld [vmem:[#allocation2] sm:$0xff]
        %v547 = vld [vmem:[#allocation2 + $0x8] sm:$0xf]
        %548 = vrot.lane.b32.xlu0 %v400, 34
        %v549 = vpop.permute.xlu0 %548
        %v550 = vrot.slane %v549, 4
        %vm551 = vcmask 277504
        %v552 = vsel %vm551, %v550, %v549
        %v555 = vmul.f32 %v546, %v552
        %v556 = vmul.f32 %v547, %v550
        %v559 = vcombine.high %v555, %v555
        %560 = vrot.lane.b32.xlu0 %v555, 94
        %v561 = vpop.permute.xlu0 %560
        %562 = vrot.lane.b32.xlu0 %v559, 94
        %v563 = vpop.permute.xlu0 %562
        %564 = vrot.lane.b32.xlu0 %v556, 94
        %v565 = vpop.permute.xlu0 %564
        %vm566 = vcmask 769024
        %v567 = vsel %vm566, %v561, %v563
        %v568 = vsel %vm566, %v563, %v565
        %571 = vst [vmem:[#allocation4 + $0x40] sm:$0xf] %v567
        %572 = vst [vmem:[#allocation4 + $0x48] sm:$0xf] %v568
        %v573 = vld [vmem:[#allocation4] sm:$0xff]
        %v574 = vld [vmem:[#allocation4 + $0x8] sm:$0xff]
        %v575 = vld [vmem:[#allocation4 + $0x10] sm:$0xff]
        %v576 = vld [vmem:[#allocation4 + $0x18] sm:$0xff]
        %v577 = vld [vmem:[#allocation4 + $0x20] sm:$0xff]
        %v578 = vld [vmem:[#allocation4 + $0x28] sm:$0xff]
        %v579 = vld [vmem:[#allocation4 + $0x30] sm:$0xff]
        %v580 = vld [vmem:[#allocation4 + $0x38] sm:$0xff]
        %v581 = vld [vmem:[#allocation4 + $0x40] sm:$0xf]
        %v582 = vld [vmem:[#allocation4 + $0x48] sm:$0xf]
        %v583 = vpack.c.bf16 %v575, %v573
        %v584 = vpack.c.bf16 %v576, %v574
        %v585 = vpack.c.bf16 %v579, %v577
        %v586 = vpack.c.bf16 %v580, %v578
        %v587 = vpack.c.bf16 %v581, %v581
        %v588 = vpack.c.bf16 %v582, %v582
        %v589 = vld [vmem:[%s3] sm:$0xf]
        %v590 = vld [vmem:[%s3 + $0x4] sm:$0xf]
        %v593 = vunpack.c.l.b16 %v589
        %v594 = vunpack.c.l.b16 %v590
        %v595 = vpack.c.b16 %v594, %v593
        %vm596 = vcmask 293888
        %v598 = vsel %vm596, %v595, 0
        %vm600 = vcmask 1041408
        %v602 = vsel %vm600, %v587, 0
        %v605 = vsel %vm600, %v588, 0
        %607 = vmatprep.subr.bf16.mxu0 0
        %608 = vmatpush1.bf16.msra.mxu0 0
        %609 = vmatprep.subr.bf16.mxu0 0
        %610 = vmatpush1.bf16.msra.mxu0 0
        %611 = vmatprep.subr.bf16.mxu0 0
        %612 = vmatpush1.bf16.msra.mxu0 0
        %613 = vmatprep.subr.bf16.mxu0 0
        %614 = vmatpush1.bf16.msra.mxu0 0
        %615 = vmatprep.subr.bf16.mxu0 0
        %616 = vmatpush1.bf16.msra.mxu0 0
        %617 = vmatprep.subr.bf16.mxu0 %v605
        %618 = vmatpush1.bf16.msra.mxu0 %v602
        %619 = vmatprep.subr.bf16.mxu0 %v586
        %620 = vmatpush1.bf16.msra.mxu0 %v585
        %621 = vmatprep.subr.bf16.mxu0 %v584
        %622 = vmatpush1.bf16.msra.mxu0 %v583
        %623 = vmatprep.subr.bf16.mxu0 0
        %624 = vmatpush2.bf16.msra.mxu0 0
        %625 = vmatprep.subr.bf16.mxu0 0
        %626 = vmatpush2.bf16.msra.mxu0 0
        %627 = vmatprep.subr.bf16.mxu0 0
        %628 = vmatpush2.bf16.msra.mxu0 0
        %629 = vmatprep.subr.bf16.mxu0 0
        %630 = vmatpush2.bf16.msra.mxu0 0
        %631 = vmatprep.subr.bf16.mxu0 0
        %632 = vmatpush2.bf16.msra.mxu0 0
        %633 = vmatprep.subr.bf16.mxu0 0
        %634 = vmatpush2.bf16.msra.mxu0 0
        %635 = vmatprep.subr.bf16.mxu0 0
        %636 = vmatpush2.bf16.msra.mxu0 0
        %637 = vmatprep.subr.bf16.mxu0 0
        %638 = vmatpush2.bf16.msra.mxu0 0
        %639 = vmatprep.mubr.bf16.mxu0 0
        %640 = vmatmul.mubr.bf16.gmra.mxu0 %v598
        %v641 = vpop.f32.mrf.mxu0
        %v642 = vadd.f32 0.0, %v641
        %v643 = vpop.f32.mrf.mxu0
        %v644 = vadd.f32 0.0, %v643
        %v645 = vpop.f32.mrf.mxu0
        %v646 = vadd.f32 0.0, %v645
        %v647 = vpop.f32.mrf.mxu0
        %v648 = vadd.f32 0.0, %v647
        %649 = vdwg.mxu0
        %v650 = vld [vmem:[%s4] sm:$0xff]
        %v651 = vld [vmem:[%s4 + $0x8] sm:$0xff]
        %653 = vset.pattern.permute.xlu0 0
        %654 = vperm.xlu0 %653, %v650
        %v655 = vpop.permute.xlu0 %654
        %658 = vset.pattern.permute.xlu0 0
        %659 = vperm.xlu0 %658, %v651
        %v660 = vpop.permute.xlu0 %659
        %v662 = vmul.f32 %v642, %v655
        %v663 = vmul.f32 %v644, %v655
        %v664 = vmul.f32 %v646, %v660
        %v665 = vmul.f32 %v648, %v660
        %v666 = vld [vmem:[%s5] sm:$0xff]
        %v667 = vld [vmem:[%s5 + $0x8] sm:$0xff]
        %669 = vset.pattern.permute.xlu0 0
        %670 = vperm.xlu0 %669, %v666
        %v671 = vpop.permute.xlu0 %670
        %674 = vset.pattern.permute.xlu0 0
        %675 = vperm.xlu0 %674, %v667
        %v676 = vpop.permute.xlu0 %675
        %v678 = vadd.f32 %v662, %v671
        %v679 = vadd.f32 %v663, %v671
        %v680 = vadd.f32 %v664, %v676
        %v681 = vadd.f32 %v665, %v676
        %v682 = vmax.f32 %v678, 0.0
        %v683 = vmax.f32 %v679, 0.0
        %v684 = vmax.f32 %v680, 0.0
        %v685 = vmax.f32 %v681, 0.0
        %686 = vst [vmem:[#allocation3] sm:$0xff] 0.0
        %687 = vst [vmem:[#allocation3 + $0x8] sm:$0xff] 0.0
        %688 = vst.msk [vmem:[#allocation3 + $0x10] sm:$0xff] %vm551, 0.0
        %691 = vrot.lane.b32.xlu0 %v682, 17
        %v692 = vpop.permute.xlu0 %691
        %693 = vrot.lane.b32.xlu0 %v683, 17
        %v694 = vpop.permute.xlu0 %693
        %v695 = vsel %vm342, %v692, %v694
        %vm699 = vcmask 1047688
        %700 = vst.msk [vmem:[#allocation3] sm:$0xff] %vm699, %v692
        %701 = vst [vmem:[#allocation3 + $0x8] sm:$0xff] %v695
        %702 = vst.msk [vmem:[#allocation3 + $0x10] sm:$0xff] %vm342, %v694
        %v703 = vld [vmem:[#allocation3] sm:$0xff]
        %v704 = vld [vmem:[#allocation3 + $0x8] sm:$0xff]
        %v707 = vmul.f32 %v703, %v357
        %v708 = vmul.f32 %v704, %v361
        %709 = vst [vmem:[#allocation5] sm:$0xff] %v707
        %710 = vst [vmem:[#allocation5 + $0x8] sm:$0xff] %v708
        %v711 = vld [vmem:[#allocation3] sm:$0xff]
        %v712 = vld [vmem:[#allocation3 + $0x8] sm:$0xff]
        %v713 = vld [vmem:[#allocation3 + $0x10] sm:$0xff]
        %717 = vrot.lane.b32.xlu0 %v711, 127
        %v718 = vpop.permute.xlu0 %717
        %719 = vrot.lane.b32.xlu0 %v712, 127
        %v720 = vpop.permute.xlu0 %719
        %721 = vrot.lane.b32.xlu0 %v713, 127
        %v722 = vpop.permute.xlu0 %721
        %v723 = vsel %vm382, %v718, %v720
        %v724 = vsel %vm382, %v720, %v722
        %727 = vst [vmem:[#allocation5 + $0x10] sm:$0xff] %v723
        %728 = vst [vmem:[#allocation5 + $0x18] sm:$0xff] %v724
        %v729 = vld [vmem:[#allocation3] sm:$0xff]
        %v730 = vld [vmem:[#allocation3 + $0x8] sm:$0xff]
        %v731 = vld [vmem:[#allocation3 + $0x10] sm:$0xff]
        %732 = vrot.lane.b32.xlu0 %v395, 2
        %v733 = vpop.permute.xlu0 %732
        %734 = vrot.lane.b32.xlu0 %v399, 2
        %v735 = vpop.permute.xlu0 %734
        %v736 = vsel %vm404, %v733, %v735
        %v740 = vmul.f32 %v729, %v733
        %v741 = vmul.f32 %v730, %v736
        %v742 = vmul.f32 %v731, %v735
        %746 = vrot.lane.b32.xlu0 %v740, 126
        %v747 = vpop.permute.xlu0 %746
        %748 = vrot.lane.b32.xlu0 %v741, 126
        %v749 = vpop.permute.xlu0 %748
        %750 = vrot.lane.b32.xlu0 %v742, 126
        %v751 = vpop.permute.xlu0 %750
        %v752 = vsel %vm419, %v747, %v749
        %v753 = vsel %vm419, %v749, %v751
        %756 = vst [vmem:[#allocation5 + $0x20] sm:$0xff] %v752
        %757 = vst [vmem:[#allocation5 + $0x28] sm:$0xff] %v753
        %v758 = vld [vmem:[#allocation3] sm:$0xff]
        %v759 = vld [vmem:[#allocation3 + $0x8] sm:$0xff]
        %v760 = vld [vmem:[#allocation3 + $0x10] sm:$0xff]
        %761 = vrot.lane.b32.xlu0 %v357, 16
        %v762 = vpop.permute.xlu0 %761
        %763 = vrot.lane.b32.xlu0 %v361, 16
        %v764 = vpop.permute.xlu0 %763
        %v765 = vsel %vm431, %v762, %v764
        %v769 = vmul.f32 %v758, %v762
        %v770 = vmul.f32 %v759, %v765
        %v771 = vmul.f32 %v760, %v764
        %775 = vrot.lane.b32.xlu0 %v769, 112
        %v776 = vpop.permute.xlu0 %775
        %777 = vrot.lane.b32.xlu0 %v770, 112
        %v778 = vpop.permute.xlu0 %777
        %779 = vrot.lane.b32.xlu0 %v771, 112
        %v780 = vpop.permute.xlu0 %779
        %v781 = vsel %vm447, %v776, %v778
        %v782 = vsel %vm447, %v778, %v780
        %785 = vst [vmem:[#allocation5 + $0x30] sm:$0xff] %v781
        %786 = vst [vmem:[#allocation5 + $0x38] sm:$0xff] %v782
        %v787 = vld [vmem:[#allocation3] sm:$0xff]
        %v788 = vld [vmem:[#allocation3 + $0x8] sm:$0xff]
        %v789 = vld [vmem:[#allocation3 + $0x10] sm:$0xff]
        %793 = vrot.lane.b32.xlu0 %v787, 111
        %v794 = vpop.permute.xlu0 %793
        %795 = vrot.lane.b32.xlu0 %v788, 111
        %v796 = vpop.permute.xlu0 %795
        %797 = vrot.lane.b32.xlu0 %v789, 111
        %v798 = vpop.permute.xlu0 %797
        %v799 = vsel %vm465, %v794, %v796
        %v800 = vsel %vm465, %v796, %v798
        %803 = vst [vmem:[#allocation5 + $0x40] sm:$0xff] %v799
        %804 = vst [vmem:[#allocation5 + $0x48] sm:$0xff] %v800
        %v805 = vld [vmem:[#allocation3] sm:$0xff]
        %v806 = vld [vmem:[#allocation3 + $0x8] sm:$0xff]
        %v807 = vld [vmem:[#allocation3 + $0x10] sm:$0xff]
        %808 = vrot.lane.b32.xlu0 %v395, 18
        %v809 = vpop.permute.xlu0 %808
        %810 = vrot.lane.b32.xlu0 %v399, 18
        %v811 = vpop.permute.xlu0 %810
        %v812 = vsel %vm477, %v809, %v811
        %v816 = vmul.f32 %v805, %v809
        %v817 = vmul.f32 %v806, %v812
        %v818 = vmul.f32 %v807, %v811
        %822 = vrot.lane.b32.xlu0 %v816, 110
        %v823 = vpop.permute.xlu0 %822
        %824 = vrot.lane.b32.xlu0 %v817, 110
        %v825 = vpop.permute.xlu0 %824
        %826 = vrot.lane.b32.xlu0 %v818, 110
        %v827 = vpop.permute.xlu0 %826
        %v828 = vsel %vm493, %v823, %v825
        %v829 = vsel %vm493, %v825, %v827
        %832 = vst [vmem:[#allocation5 + $0x50] sm:$0xff] %v828
        %833 = vst [vmem:[#allocation5 + $0x58] sm:$0xff] %v829
        %v834 = vld [vmem:[#allocation3] sm:$0xff]
        %v835 = vld [vmem:[#allocation3 + $0x8] sm:$0xff]
        %v836 = vld [vmem:[#allocation3 + $0x10] sm:$0xff]
        %837 = vrot.lane.b32.xlu0 %v357, 32
        %v838 = vpop.permute.xlu0 %837
        %839 = vrot.lane.b32.xlu0 %v361, 32
        %v840 = vpop.permute.xlu0 %839
        %v841 = vsel %vm505, %v838, %v840
        %v845 = vmul.f32 %v834, %v838
        %v846 = vmul.f32 %v835, %v841
        %v847 = vmul.f32 %v836, %v840
        %851 = vrot.lane.b32.xlu0 %v845, 96
        %v852 = vpop.permute.xlu0 %851
        %853 = vrot.lane.b32.xlu0 %v846, 96
        %v854 = vpop.permute.xlu0 %853
        %855 = vrot.lane.b32.xlu0 %v847, 96
        %v856 = vpop.permute.xlu0 %855
        %v857 = vsel %vm520, %v852, %v854
        %v858 = vsel %vm520, %v854, %v856
        %861 = vst [vmem:[#allocation5 + $0x60] sm:$0xff] %v857
        %862 = vst [vmem:[#allocation5 + $0x68] sm:$0xff] %v858
        %v863 = vld [vmem:[#allocation3] sm:$0xff]
        %v864 = vld [vmem:[#allocation3 + $0x8] sm:$0xff]
        %v865 = vld [vmem:[#allocation3 + $0x10] sm:$0xff]
        %869 = vrot.lane.b32.xlu0 %v863, 95
        %v870 = vpop.permute.xlu0 %869
        %871 = vrot.lane.b32.xlu0 %v864, 95
        %v872 = vpop.permute.xlu0 %871
        %873 = vrot.lane.b32.xlu0 %v865, 95
        %v874 = vpop.permute.xlu0 %873
        %v875 = vsel %vm539, %v870, %v872
        %v876 = vsel %vm539, %v872, %v874
        %879 = vst [vmem:[#allocation5 + $0x70] sm:$0xff] %v875
        %880 = vst [vmem:[#allocation5 + $0x78] sm:$0xff] %v876
        %v881 = vld [vmem:[#allocation3] sm:$0xff]
        %v882 = vld [vmem:[#allocation3 + $0x8] sm:$0xff]
        %v883 = vld [vmem:[#allocation3 + $0x10] sm:$0xff]
        %884 = vrot.lane.b32.xlu0 %v395, 34
        %v885 = vpop.permute.xlu0 %884
        %886 = vrot.lane.b32.xlu0 %v399, 34
        %v887 = vpop.permute.xlu0 %886
        %v888 = vsel %vm551, %v885, %v887
        %v892 = vmul.f32 %v881, %v885
        %v893 = vmul.f32 %v882, %v888
        %v894 = vmul.f32 %v883, %v887
        %898 = vrot.lane.b32.xlu0 %v892, 94
        %v899 = vpop.permute.xlu0 %898
        %900 = vrot.lane.b32.xlu0 %v893, 94
        %v901 = vpop.permute.xlu0 %900
        %902 = vrot.lane.b32.xlu0 %v894, 94
        %v903 = vpop.permute.xlu0 %902
        %v904 = vsel %vm566, %v899, %v901
        %v905 = vsel %vm566, %v901, %v903
        %908 = vst [vmem:[#allocation5 + $0x80] sm:$0xff] %v904
        %909 = vst [vmem:[#allocation5 + $0x88] sm:$0xff] %v905
        %v910 = vld [vmem:[#allocation5] sm:$0xff]
        %v911 = vld [vmem:[#allocation5 + $0x8] sm:$0xff]
        %v912 = vld [vmem:[#allocation5 + $0x10] sm:$0xff]
        %v913 = vld [vmem:[#allocation5 + $0x18] sm:$0xff]
        %v914 = vld [vmem:[#allocation5 + $0x20] sm:$0xff]
        %v915 = vld [vmem:[#allocation5 + $0x28] sm:$0xff]
        %v916 = vld [vmem:[#allocation5 + $0x30] sm:$0xff]
        %v917 = vld [vmem:[#allocation5 + $0x38] sm:$0xff]
        %v918 = vld [vmem:[#allocation5 + $0x40] sm:$0xff]
        %v919 = vld [vmem:[#allocation5 + $0x48] sm:$0xff]
        %v920 = vld [vmem:[#allocation5 + $0x50] sm:$0xff]
        %v921 = vld [vmem:[#allocation5 + $0x58] sm:$0xff]
        %v922 = vld [vmem:[#allocation5 + $0x60] sm:$0xff]
        %v923 = vld [vmem:[#allocation5 + $0x68] sm:$0xff]
        %v924 = vld [vmem:[#allocation5 + $0x70] sm:$0xff]
        %v925 = vld [vmem:[#allocation5 + $0x78] sm:$0xff]
        %v926 = vld [vmem:[#allocation5 + $0x80] sm:$0xff]
        %v927 = vld [vmem:[#allocation5 + $0x88] sm:$0xff]
        %v928 = vpack.c.bf16 %v912, %v910
        %v929 = vpack.c.bf16 %v913, %v911
        %v930 = vpack.c.bf16 %v916, %v914
        %v931 = vpack.c.bf16 %v917, %v915
        %v932 = vpack.c.bf16 %v920, %v918
        %v933 = vpack.c.bf16 %v921, %v919
        %v934 = vpack.c.bf16 %v924, %v922
        %v935 = vpack.c.bf16 %v925, %v923
        %v936 = vpack.c.bf16 %v926, %v926
        %v937 = vpack.c.bf16 %v927, %v927
        %v938 = vld [vmem:[%s6] sm:$0xf]
        %vm939 = vcmask 588800
        %v941 = vsel %vm939, %v938, 0
        %vm943 = vcmask 1043456
        %v945 = vsel %vm943, %v936, 0
        %v948 = vsel %vm943, %v937, 0
        %950 = vmatprep.subr.bf16.mxu0 0
        %951 = vmatpush1.bf16.msra.mxu0 0
        %952 = vmatprep.subr.bf16.mxu0 0
        %953 = vmatpush1.bf16.msra.mxu0 0
        %954 = vmatprep.subr.bf16.mxu0 0
        %955 = vmatpush1.bf16.msra.mxu0 0
        %956 = vmatprep.subr.bf16.mxu0 %v948
        %957 = vmatpush1.bf16.msra.mxu0 %v945
        %958 = vmatprep.subr.bf16.mxu0 %v935
        %959 = vmatpush1.bf16.msra.mxu0 %v934
        %960 = vmatprep.subr.bf16.mxu0 %v933
        %961 = vmatpush1.bf16.msra.mxu0 %v932
        %962 = vmatprep.subr.bf16.mxu0 %v931
        %963 = vmatpush1.bf16.msra.mxu0 %v930
        %964 = vmatprep.subr.bf16.mxu0 %v929
        %965 = vmatpush1.bf16.msra.mxu0 %v928
        %966 = vmatprep.subr.bf16.mxu0 0
        %967 = vmatpush2.bf16.msra.mxu0 0
        %968 = vmatprep.subr.bf16.mxu0 0
        %969 = vmatpush2.bf16.msra.mxu0 0
        %970 = vmatprep.subr.bf16.mxu0 0
        %971 = vmatpush2.bf16.msra.mxu0 0
        %972 = vmatprep.subr.bf16.mxu0 0
        %973 = vmatpush2.bf16.msra.mxu0 0
        %974 = vmatprep.subr.bf16.mxu0 0
        %975 = vmatpush2.bf16.msra.mxu0 0
        %976 = vmatprep.subr.bf16.mxu0 0
        %977 = vmatpush2.bf16.msra.mxu0 0
        %978 = vmatprep.subr.bf16.mxu0 0
        %979 = vmatpush2.bf16.msra.mxu0 0
        %980 = vmatprep.subr.bf16.mxu0 0
        %981 = vmatpush2.bf16.msra.mxu0 0
        %982 = vmatprep.mubr.bf16.mxu0 0
        %983 = vmatmul.mubr.bf16.gmra.mxu0 %v941
        %v984 = vpop.f32.mrf.mxu0
        %v985 = vadd.f32 0.0, %v984
        %v986 = vpop.f32.mrf.mxu0
        %v987 = vadd.f32 0.0, %v986
        %v988 = vpop.f32.mrf.mxu0
        %v989 = vpop.f32.mrf.mxu0
        %990 = vdwg.mxu0
        %v991 = vld [vmem:[%s7] sm:$0xff]
        %993 = vset.pattern.permute.xlu0 0
        %994 = vperm.xlu0 %993, %v991
        %v995 = vpop.permute.xlu0 %994
        %v997 = vmul.f32 %v985, %v995
        %v998 = vmul.f32 %v987, %v995
        %v999 = vld [vmem:[%s8] sm:$0xff]
        %1001 = vset.pattern.permute.xlu0 0
        %1002 = vperm.xlu0 %1001, %v999
        %v1003 = vpop.permute.xlu0 %1002
        %v1005 = vadd.f32 %v997, %v1003
        %v1006 = vadd.f32 %v998, %v1003
        %v1007 = vmax.f32 %v1005, 0.0
        %v1008 = vmax.f32 %v1006, 0.0
        %v1009 = vadd.f32 %v684, %v1007
        %v1010 = vadd.f32 %v685, %v1008
        %1011 = vst [vmem:[%s325] sm:$0xff] %v1009
        %1012 = vst [vmem:[%s325 + $0x8] sm:$0xff] %v1010
        %s1013 = sand.u32 %s225, 1
        %s1014 = scalar_lea.sflag [#allocation7], %s1013
        %s1015 = sand.u32 %s225, 1
        %s1016 = smul.addr %s1015, 16
        %s1017 = scalar_lea.vmem [#allocation6], %s1016
        // Predicated region
        $region57: #{tpu_custom_call.1} parent=55 // pred_check
          %p1018 = pneg %p235
        $region58: #{tpu_custom_call.1} parent=55 // pred_check_branch
          %1020 = sbr.rel (%p1018) target = $region60
        $region59: #{tpu_custom_call.1} parent=55 // pred_region
          %s1022 = ssub.s32 256, 256
          %1023 = vsyncadd %s1014, %s1022
          %s1024 = smul.addr %s23, 2
          %s1025 = smul.addr %s1024, 128
          %s1026 = scalar_lea.hbm %s9, %s1025
          %s1028 = sshll.u32 %s1017, 4
          %s1029 = int_to_ptr.vmem [resolvable:$true] %s1028
          %1031 = dma.vmem_to_hbm [thread:$0]  %s1029, 256, %s1026, %s1014
        $region60: #{tpu_custom_call.1} parent=55 // pred_fallthru
          _
      $region56: #{tpu_custom_call.1} parent=5 // pred_fallthru
        _
      %p1032 = scmp.le.s32.totalorder 2, %s18
      // Predicated region
      $region61: #{tpu_custom_call.1} parent=5 // pred_check
        %p1033 = pneg %p1032
      $region62: #{tpu_custom_call.1} parent=5 // pred_check_branch
        %1035 = sbr.rel (%p1033) target = $region64
      $region63: #{tpu_custom_call.1} parent=5 // pred_region
        %s1036 = ssub.s32 %s18, 2
        // Predicated region
        $region65: #{tpu_custom_call.1} parent=63 // pred_check
          %p1037 = pneg %p241
        $region66: #{tpu_custom_call.1} parent=63 // pred_check_branch
          %1039 = sbr.rel (%p1037) target = $region68
        $region67: #{tpu_custom_call.1} parent=63 // pred_region
          %s1040 = sand.u32 %s226, 1
          %s1041 = scalar_lea.sflag [#allocation7], %s1040
          %s1042 = sand.u32 %s226, 1
          %s1043 = smul.addr %s1042, 16
          %s1044 = scalar_lea.vmem [#allocation6], %s1043
          %1045 = dma.done %s1041, 256
        $region68: #{tpu_custom_call.1} parent=63 // pred_fallthru
          _
      $region64: #{tpu_custom_call.1} parent=5 // pred_fallthru
        _
    $region6: #{tpu_custom_call.1} parent=1 // loop_footer
      %s22 = sadd.s32 1, %s18
    $region7: #{tpu_custom_call.1} parent=1 // loop_footer_branch
      %17 = sbr.rel target = $region3
    $region8: #{tpu_custom_call.1} parent=1 // loop_exit
      _
    %1046 = vsyncpa [#allocation7], 1
    %s1047 = scalar_lea.sflag [#allocation7], 1
    %1048 = vsyncpa %s1047, 1

</llo_original>
